<compile_context>
chip_gen: v6e
topology: v6e:2x2x1
jax: 0.10.0
libtpu: 0.0.40
codegen_flags: <defaults>
</compile_context>

<pallas_src>
import functools

import jax
import jax.numpy as jnp
from jax.experimental import pallas as pl
from jax.experimental.pallas import tpu as pltpu

_LANE = 128        # lane width: pad hidden / final N to a multiple of this
_SUBLANE = 8       # f32 sublane pack
_TILE_B_MAX = 1024  # raised from 256: amortize ~0.35us per-grid-step overhead
_SPLIT_MIN_B = 256  # split into >=2 batch tiles (v7x megacore) only above this


def _round_up(x, m):
    return ((x + m - 1) // m) * m


def _mlp_kernel(x_ref, w1_ref, b1_ref, w2_ref, b2_ref, w3_ref, b3_ref, o_ref):
    """relu(relu(x@W1+b1)@W2+b2)@W3+b3 — 3 MXU matmuls + VPU bias/ReLU.

    Weights arrive pre-transposed to (in, out) and zero-padded so that the
    hidden dim and the output N are multiples of 128 (lane-dense everywhere).
    Bias/ReLU math stays in f32 (accumulator dtype); activations are cast to
    the weight dtype before each dot so a bf16 weight path keeps bf16 MXU
    throughput.
    """
    h1 = jnp.dot(x_ref[...], w1_ref[...], preferred_element_type=jnp.float32)
    h1 = jnp.maximum(h1 + b1_ref[...], 0.0)

    h2 = jnp.dot(h1.astype(w2_ref.dtype), w2_ref[...],
                 preferred_element_type=jnp.float32)
    h2 = jnp.maximum(h2 + b2_ref[...], 0.0)

    out = jnp.dot(h2.astype(w3_ref.dtype), w3_ref[...],
                  preferred_element_type=jnp.float32)
    o_ref[...] = (out + b3_ref[...]).astype(o_ref.dtype)


def prepare_params(w1, b1, w2, b2, w3, b3, compute_dtype=jnp.float32):
    """One-time layout conversion from PyTorch nn.Linear layout.

    (out, in) weights -> (in, out); biases -> (1, out) rows.  The hidden dim
    and the last layer's N are zero-padded to multiples of 128 so every
    intermediate and the output store are lane-dense.  Weights optionally
    cast to `compute_dtype` (e.g. bf16); biases stay f32 (epilogue is f32).
    Call this ONCE, not per forward.
    """
    in_features = w1.shape[1]
    hidden = w1.shape[0]
    n = w3.shape[0]
    hidden_pad = _round_up(hidden, _LANE)
    n_pad = _round_up(n, _LANE)

    def pad2(a, rows, cols):
        return jnp.pad(a, ((0, rows - a.shape[0]), (0, cols - a.shape[1])))

    w1_t = pad2(jnp.asarray(w1, jnp.float32).T, in_features, hidden_pad)
    w2_t = pad2(jnp.asarray(w2, jnp.float32).T, hidden_pad, hidden_pad)
    w3_t = pad2(jnp.asarray(w3, jnp.float32).T, hidden_pad, n_pad)

    b1_r = pad2(jnp.asarray(b1, jnp.float32).reshape(1, -1), 1, hidden_pad)
    b2_r = pad2(jnp.asarray(b2, jnp.float32).reshape(1, -1), 1, hidden_pad)
    b3_r = pad2(jnp.asarray(b3, jnp.float32).reshape(1, -1), 1, n_pad)

    return (w1_t.astype(compute_dtype), b1_r,
            w2_t.astype(compute_dtype), b2_r,
            w3_t.astype(compute_dtype), b3_r)


def _choose_tile_b(B):
    """Batch tile: sublane-aligned, <= _TILE_B_MAX, prefers (a) no batch
    padding and (b) >= 2 grid steps once B is big enough (v7x megacore)."""
    b8 = _round_up(B, _SUBLANE)
    if b8 <= _TILE_B_MAX:
        if b8 >= _SPLIT_MIN_B and b8 % (2 * _SUBLANE) == 0:
            return b8 // 2          # 2 even tiles, no tail pad -> both v7x TCs busy
        return b8                   # small batch: one tile, no pad, min overhead
    # Large batch: biggest multiple-of-8 tile that divides b8 (no tail pad)
    # while keeping the grid short; otherwise cap at _TILE_B_MAX and pad.
    for t in range(_TILE_B_MAX, _SUBLANE - 1, -_SUBLANE):
        if b8 % t == 0 and b8 // t <= 64:
            return t
    return _TILE_B_MAX


@functools.partial(jax.jit, static_argnames=("num_classes",))
def neural_network_forward(x, w1_t, b1_r, w2_t, b2_r, w3_t, b3_r, *,
                           num_classes):
    """x: (B, input_size); params from prepare_params(); returns (B, num_classes) f32."""
    B, in_features = x.shape
    hidden_pad = w1_t.shape[1]
    n_pad = w3_t.shape[1]

    x = x.astype(w1_t.dtype)        # no-op for the default f32 path

    tile_b = _choose_tile_b(B)
    b_pad = _round_up(B, tile_b)
    if b_pad != B:                  # only hit when no dividing tile exists
        x = jnp.pad(x, ((0, b_pad - B), (0, 0)))
    grid = (b_pad // tile_b,)

    # Constant index_maps => weights/biases DMA'd once, resident across tiles.
    const = lambda i: (0, 0)
    tiled = lambda i: (i, 0)

    itm = jnp.dtype(w1_t.dtype).itemsize
    cost = pl.CostEstimate(
        flops=2 * b_pad * (in_features * hidden_pad
                           + hidden_pad * hidden_pad
                           + hidden_pad * n_pad),
        transcendentals=0,
        bytes_accessed=(itm * b_pad * in_features
                        + itm * (in_features * hidden_pad
                                 + hidden_pad * hidden_pad
                                 + hidden_pad * n_pad)
                        + 4 * (2 * hidden_pad + n_pad)
                        + 4 * b_pad * n_pad),
    )

    out_padded = pl.pallas_call(
        _mlp_kernel,
        out_shape=jax.ShapeDtypeStruct((b_pad, n_pad), jnp.float32),
        grid_spec=pltpu.PrefetchScalarGridSpec(
            num_scalar_prefetch=0,
            grid=grid,
            in_specs=[
                pl.BlockSpec((tile_b, in_features), tiled),      # x
                pl.BlockSpec((in_features, hidden_pad), const),  # W1 (in, hid_pad)
                pl.BlockSpec((1, hidden_pad), const),            # b1
                pl.BlockSpec((hidden_pad, hidden_pad), const),   # W2
                pl.BlockSpec((1, hidden_pad), const),            # b2
                pl.BlockSpec((hidden_pad, n_pad), const),        # W3 (hid_pad, n_pad)
                pl.BlockSpec((1, n_pad), const),                 # b3
            ],
            out_specs=pl.BlockSpec((tile_b, n_pad), tiled),
        ),
        compiler_params=pltpu.CompilerParams(
            dimension_semantics=("parallel",),   # batch tiles shard over v7x's 2 TCs
        ),
        cost_estimate=cost,
    )(x, w1_t, b1_r, w2_t, b2_r, w3_t, b3_r)

    # Strip batch / lane padding (cheap wrapper-side slice).
    return out_padded[:B, :num_classes]


def init_params(key, input_size, hidden_size, num_classes):
    """PyTorch nn.Linear default init: uniform(+-1/sqrt(fan_in)), (out, in) layout."""
    ks = jax.random.split(key, 6)

    def lin(kw, kb, fan_in, fan_out):
        bound = 1.0 / jnp.sqrt(jnp.float32(fan_in))
        w = jax.random.uniform(kw, (fan_out, fan_in), jnp.float32, -bound, bound)
        b = jax.random.uniform(kb, (fan_out,), jnp.float32, -bound, bound)
        return w, b

    w1, b1 = lin(ks[0], ks[1], input_size, hidden_size)
    w2, b2 = lin(ks[2], ks[3], hidden_size, hidden_size)
    w3, b3 = lin(ks[4], ks[5], hidden_size, num_classes)
    return w1, b1, w2, b2, w3, b3


if __name__ == "__main__":
    input_size, hidden_size, num_classes = 32, 64, 16
    batch = 8

    key = jax.random.PRNGKey(0)
    k_x, k_p = jax.random.split(key)

    x = jax.random.normal(k_x, (batch, input_size), jnp.float32)
    w1, b1, w2, b2, w3, b3 = init_params(k_p, input_size, hidden_size, num_classes)

    # One-time layout conversion + padding (kept out of the per-call hot path).
    prepared = prepare_params(w1, b1, w2, b2, w3, b3)  # compute_dtype=jnp.bfloat16 for speed

    out = neural_network_forward(x, *prepared, num_classes=num_classes)
    out = jax.block_until_ready(out)

    # Reference in plain JAX (same math as the PyTorch forward, f32).
    ref = jnp.maximum(x @ w1.T + b1, 0.0)
    ref = jnp.maximum(ref @ w2.T + b2, 0.0)
    ref = ref @ w3.T + b3

    assert out.shape == (batch, num_classes)
    assert jnp.allclose(out, ref, atol=1e-5, rtol=1e-5)

    print("KERNEL_OK")
</pallas_src>

<mosaic_0001>
module attributes {stable_mosaic.version = 11 : i64} {
  func.func @_mlp_kernel(%arg0: i32, %arg1: memref<8x32xf32, #tpu.memory_space<vmem>>, %arg2: memref<32x128xf32, #tpu.memory_space<vmem>>, %arg3: memref<1x128xf32, #tpu.memory_space<vmem>>, %arg4: memref<128x128xf32, #tpu.memory_space<vmem>>, %arg5: memref<1x128xf32, #tpu.memory_space<vmem>>, %arg6: memref<128x128xf32, #tpu.memory_space<vmem>>, %arg7: memref<1x128xf32, #tpu.memory_space<vmem>>, %arg8: memref<8x128xf32, #tpu.memory_space<vmem>>) attributes {dimension_semantics = [#tpu.dimension_semantics<parallel>], iteration_bounds = array<i64: 1>, scalar_prefetch = 0 : i64, scratch_operands = 0 : i64, tpu.core_type = #tpu.core_type<tc>, window_params = [{transform_indices = @transform_0, window_bounds = array<i64: 8, 32>}, {pipeline_mode = #tpu.pipeline_mode<synchronous>, transform_indices = @transform_1, window_bounds = array<i64: 32, 128>}, {pipeline_mode = #tpu.pipeline_mode<synchronous>, transform_indices = @transform_2, window_bounds = array<i64: 1, 128>}, {pipeline_mode = #tpu.pipeline_mode<synchronous>, transform_indices = @transform_3, window_bounds = array<i64: 128, 128>}, {pipeline_mode = #tpu.pipeline_mode<synchronous>, transform_indices = @transform_4, window_bounds = array<i64: 1, 128>}, {pipeline_mode = #tpu.pipeline_mode<synchronous>, transform_indices = @transform_5, window_bounds = array<i64: 128, 128>}, {pipeline_mode = #tpu.pipeline_mode<synchronous>, transform_indices = @transform_6, window_bounds = array<i64: 1, 128>}, {transform_indices = @transform_7, window_bounds = array<i64: 8, 128>}]} {
    %c0 = arith.constant 0 : index
    %c0_0 = arith.constant 0 : index
    %0 = vector.load %arg1[%c0, %c0_0] : memref<8x32xf32, #tpu.memory_space<vmem>>, vector<8x32xf32>
    %c0_1 = arith.constant 0 : index
    %c0_2 = arith.constant 0 : index
    %1 = vector.load %arg2[%c0_1, %c0_2] : memref<32x128xf32, #tpu.memory_space<vmem>>, vector<32x128xf32>
    %cst = arith.constant dense<0.000000e+00> : vector<8x128xf32>
    %2 = tpu.matmul %0, %1, %cst {dimension_numbers = #tpu.dot_dimension_numbers<[1], [0], [0], [1], [0, 0, 1, 1], [], []>} : vector<8x32xf32>, vector<32x128xf32>, vector<8x128xf32> -> vector<8x128xf32>
    %c0_3 = arith.constant 0 : index
    %c0_4 = arith.constant 0 : index
    %3 = vector.load %arg3[%c0_3, %c0_4] : memref<1x128xf32, #tpu.memory_space<vmem>>, vector<1x128xf32>
    %4 = vector.broadcast %3 : vector<1x128xf32> to vector<8x128xf32>
    %5 = arith.addf %2, %4 : vector<8x128xf32>
    %cst_5 = arith.constant 0.000000e+00 : f32
    %6 = vector.broadcast %cst_5 : f32 to vector<8x128xf32>
    %7 = arith.maximumf %5, %6 : vector<8x128xf32>
    %c0_6 = arith.constant 0 : index
    %c0_7 = arith.constant 0 : index
    %8 = vector.load %arg4[%c0_6, %c0_7] : memref<128x128xf32, #tpu.memory_space<vmem>>, vector<128x128xf32>
    %cst_8 = arith.constant dense<0.000000e+00> : vector<8x128xf32>
    %9 = tpu.matmul %7, %8, %cst_8 {dimension_numbers = #tpu.dot_dimension_numbers<[1], [0], [0], [1], [0, 0, 1, 1], [], []>} : vector<8x128xf32>, vector<128x128xf32>, vector<8x128xf32> -> vector<8x128xf32>
    %c0_9 = arith.constant 0 : index
    %c0_10 = arith.constant 0 : index
    %10 = vector.load %arg5[%c0_9, %c0_10] : memref<1x128xf32, #tpu.memory_space<vmem>>, vector<1x128xf32>
    %11 = vector.broadcast %10 : vector<1x128xf32> to vector<8x128xf32>
    %12 = arith.addf %9, %11 : vector<8x128xf32>
    %cst_11 = arith.constant 0.000000e+00 : f32
    %13 = vector.broadcast %cst_11 : f32 to vector<8x128xf32>
    %14 = arith.maximumf %12, %13 : vector<8x128xf32>
    %c0_12 = arith.constant 0 : index
    %c0_13 = arith.constant 0 : index
    %15 = vector.load %arg6[%c0_12, %c0_13] : memref<128x128xf32, #tpu.memory_space<vmem>>, vector<128x128xf32>
    %cst_14 = arith.constant dense<0.000000e+00> : vector<8x128xf32>
    %16 = tpu.matmul %14, %15, %cst_14 {dimension_numbers = #tpu.dot_dimension_numbers<[1], [0], [0], [1], [0, 0, 1, 1], [], []>} : vector<8x128xf32>, vector<128x128xf32>, vector<8x128xf32> -> vector<8x128xf32>
    %c0_15 = arith.constant 0 : index
    %c0_16 = arith.constant 0 : index
    %17 = vector.load %arg7[%c0_15, %c0_16] : memref<1x128xf32, #tpu.memory_space<vmem>>, vector<1x128xf32>
    %18 = vector.broadcast %17 : vector<1x128xf32> to vector<8x128xf32>
    %19 = arith.addf %16, %18 : vector<8x128xf32>
    %c0_17 = arith.constant 0 : index
    %c0_18 = arith.constant 0 : index
    %20 = vector.load %arg8[%c0_17, %c0_18] : memref<8x128xf32, #tpu.memory_space<vmem>>, vector<8x128xf32>
    tpu.vector_store %arg8[%c0_17, %c0_18], %19 {strides = array<i32>} : memref<8x128xf32, #tpu.memory_space<vmem>>, vector<8x128xf32>,
    return
  }
  func.func @transform_0(%arg0: i32) -> (i32, i32) {
    %c0_i32 = arith.constant 0 : i32
    %c0_i32_0 = arith.constant 0 : i32
    return %arg0, %c0_i32 : i32, i32
  }
  func.func @transform_1(%arg0: i32) -> (i32, i32) {
    %c0_i32 = arith.constant 0 : i32
    %c0_i32_0 = arith.constant 0 : i32
    %c0_i32_1 = arith.constant 0 : i32
    return %c0_i32, %c0_i32_0 : i32, i32
  }
  func.func @transform_2(%arg0: i32) -> (i32, i32) {
    %c0_i32 = arith.constant 0 : i32
    %c0_i32_0 = arith.constant 0 : i32
    %c0_i32_1 = arith.constant 0 : i32
    return %c0_i32, %c0_i32_0 : i32, i32
  }
  func.func @transform_3(%arg0: i32) -> (i32, i32) {
    %c0_i32 = arith.constant 0 : i32
    %c0_i32_0 = arith.constant 0 : i32
    %c0_i32_1 = arith.constant 0 : i32
    return %c0_i32, %c0_i32_0 : i32, i32
  }
  func.func @transform_4(%arg0: i32) -> (i32, i32) {
    %c0_i32 = arith.constant 0 : i32
    %c0_i32_0 = arith.constant 0 : i32
    %c0_i32_1 = arith.constant 0 : i32
    return %c0_i32, %c0_i32_0 : i32, i32
  }
  func.func @transform_5(%arg0: i32) -> (i32, i32) {
    %c0_i32 = arith.constant 0 : i32
    %c0_i32_0 = arith.constant 0 : i32
    %c0_i32_1 = arith.constant 0 : i32
    return %c0_i32, %c0_i32_0 : i32, i32
  }
  func.func @transform_6(%arg0: i32) -> (i32, i32) {
    %c0_i32 = arith.constant 0 : i32
    %c0_i32_0 = arith.constant 0 : i32
    %c0_i32_1 = arith.constant 0 : i32
    return %c0_i32, %c0_i32_0 : i32, i32
  }
  func.func @transform_7(%arg0: i32) -> (i32, i32) {
    %c0_i32 = arith.constant 0 : i32
    %c0_i32_0 = arith.constant 0 : i32
    return %arg0, %c0_i32 : i32, i32
  }
}

</mosaic_0001>

<llo_original>
// kernel: neural_network_forward.1
$region0: #{neural_network_forward.1}
  #allocation0 [shape = 'u32[]', space=smem, size = 0x4, offset = 0x4, fixed_abs, tag = 'smem constant byte address 0x4 - core index']
  #allocation1 [shape = 'u32[144,128]{1,0:T(1,128)}', space=vmem, size = 0x12000, scoped, tag = 'internal scratch']
  %s0 = inlined_call_operand.hbm [shape: f32[8,32], index: 0, kind: input, shape index: {}]
  %s1 = inlined_call_operand.hbm [shape: f32[32,128], index: 1, kind: input, shape index: {}]
  %s2 = inlined_call_operand.vmem [shape: f32[1,128], index: 2, kind: input, shape index: {}]
  %s3 = inlined_call_operand.hbm [shape: f32[128,128], index: 3, kind: input, shape index: {}]
  %s4 = inlined_call_operand.vmem [shape: f32[1,128], index: 4, kind: input, shape index: {}]
  %s5 = inlined_call_operand.hbm [shape: f32[128,128], index: 5, kind: input, shape index: {}]
  %s6 = inlined_call_operand.vmem [shape: f32[1,128], index: 6, kind: input, shape index: {}]
  %s7 = inlined_call_operand.hbm [shape: f32[8,128], index: 7, kind: output, shape index: {}]
  %s8 = sld [smem:[#allocation0]]
  $region54: #{neural_network_forward.1} parent=0
    _
  %s10 = ssub.s32 1, %s8
  %s11 = scalar_select 0, %s10, %s8
  $region1: #{neural_network_forward.1} parent=0
    #allocation2 [shape = 'u8[4096]{0}', space=vmem, size = 0x1000, scoped, tag = 'input window, operand 0, single buffered']
    #allocation3 [shape = 's32[1]{0}', space=sflag, size = 0x4, scoped, tag = 'scoped memory for neural_network_forward.1']
    #allocation4 [shape = 's32[1]{0}', space=sflag, size = 0x4, scoped, tag = 'scoped memory for neural_network_forward.1']
    #allocation5 [shape = 'u8[16384]{0}', space=vmem, size = 0x4000, scoped, tag = 'input window, operand 1, single buffered']
    #allocation6 [shape = 's32[1]{0}', space=sflag, size = 0x4, scoped, tag = 'scoped memory for neural_network_forward.1']
    #allocation7 [shape = 'u8[65536]{0}', space=vmem, size = 0x10000, scoped, tag = 'input window, operand 3, single buffered']
    #allocation8 [shape = 'u8[65536]{0}', space=vmem, size = 0x10000, scoped, tag = 'input window, operand 5, single buffered']
    #allocation9 [shape = 's32[1]{0}', space=sflag, size = 0x4, scoped, tag = 'scoped memory for neural_network_forward.1']
    #allocation10 [shape = 'u8[4096]{0}', space=vmem, size = 0x1000, scoped, tag = 'output window, operand 0, single buffered']
    %12 = vsyncpa [#allocation3], 0
    %13 = vsyncpa [#allocation6], 0
    %14 = vsyncpa [#allocation9], 0
    %15 = vsyncpa [#allocation4], 0
    // Predicated region
    $region2: #{neural_network_forward.1} parent=1 // pred_check
      _
    $region3: #{neural_network_forward.1} parent=1 // pred_check_branch
      %17 = sbr.rel (0) target = $region5
    $region4: #{neural_network_forward.1} parent=1 // pred_region
      %s19 = ssub.s32 128, 128
      %20 = vsyncadd [#allocation3], %s19
      %s22 = sshll.u32 [#allocation2], 4
      %s23 = int_to_ptr.vmem [resolvable:$true] %s22
      %25 = dma.hbm_to_vmem [thread:$0]  %s0, 128, %s23, [#allocation3]
    $region5: #{neural_network_forward.1} parent=1 // pred_fallthru
      _
    // Predicated region
    $region6: #{neural_network_forward.1} parent=1 // pred_check
      _
    $region7: #{neural_network_forward.1} parent=1 // pred_check_branch
      %27 = sbr.rel (0) target = $region9
    $region8: #{neural_network_forward.1} parent=1 // pred_region
      %s29 = ssub.s32 512, 512
      %30 = vsyncadd [#allocation6], %s29
      %s31 = sshll.u32 [#allocation5], 4
      %s32 = int_to_ptr.vmem [resolvable:$true] %s31
      %37 = dma.hbm_to_vmem [thread:$0]  %s1, 512, %s32, [#allocation6], 128, 128, 8
    $region9: #{neural_network_forward.1} parent=1 // pred_fallthru
      _
    // Predicated region
    $region10: #{neural_network_forward.1} parent=1 // pred_check
      _
    $region11: #{neural_network_forward.1} parent=1 // pred_check_branch
      %39 = sbr.rel (0) target = $region13
    $region12: #{neural_network_forward.1} parent=1 // pred_region
      _
    $region13: #{neural_network_forward.1} parent=1 // pred_fallthru
      _
    // Predicated region
    $region14: #{neural_network_forward.1} parent=1 // pred_check
      _
    $region15: #{neural_network_forward.1} parent=1 // pred_check_branch
      %41 = sbr.rel (0) target = $region17
    $region16: #{neural_network_forward.1} parent=1 // pred_region
      %s43 = ssub.s32 2048, 2048
      %44 = vsyncadd [#allocation6], %s43
      %s45 = sshll.u32 [#allocation7], 4
      %s46 = int_to_ptr.vmem [resolvable:$true] %s45
      %51 = dma.hbm_to_vmem [thread:$0]  %s3, 2048, %s46, [#allocation6], 128, 128, 8
    $region17: #{neural_network_forward.1} parent=1 // pred_fallthru
      _
    // Predicated region
    $region18: #{neural_network_forward.1} parent=1 // pred_check
      _
    $region19: #{neural_network_forward.1} parent=1 // pred_check_branch
      %53 = sbr.rel (0) target = $region21
    $region20: #{neural_network_forward.1} parent=1 // pred_region
      _
    $region21: #{neural_network_forward.1} parent=1 // pred_fallthru
      _
    // Predicated region
    $region22: #{neural_network_forward.1} parent=1 // pred_check
      _
    $region23: #{neural_network_forward.1} parent=1 // pred_check_branch
      %55 = sbr.rel (0) target = $region25
    $region24: #{neural_network_forward.1} parent=1 // pred_region
      %s57 = ssub.s32 2048, 2048
      %58 = vsyncadd [#allocation9], %s57
      %s59 = sshll.u32 [#allocation8], 4
      %s60 = int_to_ptr.vmem [resolvable:$true] %s59
      %65 = dma.hbm_to_vmem [thread:$0]  %s5, 2048, %s60, [#allocation9], 128, 128, 8
    $region25: #{neural_network_forward.1} parent=1 // pred_fallthru
      _
    // Predicated region
    $region26: #{neural_network_forward.1} parent=1 // pred_check
      _
    $region27: #{neural_network_forward.1} parent=1 // pred_check_branch
      %67 = sbr.rel (0) target = $region29
    $region28: #{neural_network_forward.1} parent=1 // pred_region
      _
    $region29: #{neural_network_forward.1} parent=1 // pred_fallthru
      _
    // Predicated region
    $region30: #{neural_network_forward.1} parent=1 // pred_check
      _
    $region31: #{neural_network_forward.1} parent=1 // pred_check_branch
      %69 = sbr.rel (0) target = $region33
    $region32: #{neural_network_forward.1} parent=1 // pred_region
      %70 = dma.done [#allocation3], 128
    $region33: #{neural_network_forward.1} parent=1 // pred_fallthru
      _
    // Predicated region
    $region34: #{neural_network_forward.1} parent=1 // pred_check
      _
    $region35: #{neural_network_forward.1} parent=1 // pred_check_branch
      %72 = sbr.rel (0) target = $region37
    $region36: #{neural_network_forward.1} parent=1 // pred_region
      %73 = dma.done [#allocation6], 512
    $region37: #{neural_network_forward.1} parent=1 // pred_fallthru
      _
    // Predicated region
    $region38: #{neural_network_forward.1} parent=1 // pred_check
      _
    $region39: #{neural_network_forward.1} parent=1 // pred_check_branch
      %75 = sbr.rel (0) target = $region41
    $region40: #{neural_network_forward.1} parent=1 // pred_region
      %76 = dma.done [#allocation6], 2048
    $region41: #{neural_network_forward.1} parent=1 // pred_fallthru
      _
    // Predicated region
    $region42: #{neural_network_forward.1} parent=1 // pred_check
      _
    $region43: #{neural_network_forward.1} parent=1 // pred_check_branch
      %78 = sbr.rel (0) target = $region45
    $region44: #{neural_network_forward.1} parent=1 // pred_region
      %79 = dma.done [#allocation9], 2048
    $region45: #{neural_network_forward.1} parent=1 // pred_fallthru
      _
    %v80 = vld [vmem:[#allocation2] sm:$0xff]
    %v81 = vld [vmem:[#allocation5] sm:$0xff]
    %v82 = vld [vmem:[#allocation5 + $0x8] sm:$0xff]
    %v83 = vld [vmem:[#allocation5 + $0x10] sm:$0xff]
    %v84 = vld [vmem:[#allocation5 + $0x18] sm:$0xff]
    %v85 = vld [vmem:[%s2] sm:$0x1]
    %v87 = vlaneseq
    %v88 = vshrl.u32 %v87, 7
    %v89 = vsub.s32 0, %v88
    %v90 = vrot.slane %v85, %v89
    %vm92 = vcmask 261120
    %v94 = vsel %vm92, %v80, 0
    %96 = vmatprep.subr.mxu0 0.0
    %97 = vmatpush1.msra.mxu0 0.0
    %98 = vmatprep.subr.mxu0 0.0
    %99 = vmatpush1.msra.mxu0 0.0
    %100 = vmatprep.subr.mxu0 0.0
    %101 = vmatpush1.msra.mxu0 0.0
    %102 = vmatprep.subr.mxu0 0.0
    %103 = vmatpush1.msra.mxu0 0.0
    %104 = vmatprep.subr.mxu0 0.0
    %105 = vmatpush1.msra.mxu0 0.0
    %106 = vmatprep.subr.mxu0 0.0
    %107 = vmatpush1.msra.mxu0 0.0
    %108 = vmatprep.subr.mxu0 0.0
    %109 = vmatpush1.msra.mxu0 0.0
    %110 = vmatprep.subr.mxu0 0.0
    %111 = vmatpush1.msra.mxu0 0.0
    %112 = vmatprep.subr.mxu0 0.0
    %113 = vmatpush1.msra.mxu0 0.0
    %114 = vmatprep.subr.mxu0 0.0
    %115 = vmatpush1.msra.mxu0 0.0
    %116 = vmatprep.subr.mxu0 0.0
    %117 = vmatpush1.msra.mxu0 0.0
    %118 = vmatprep.subr.mxu0 0.0
    %119 = vmatpush1.msra.mxu0 0.0
    %120 = vmatprep.subr.mxu0 0.0
    %121 = vmatpush1.msra.mxu0 %v84
    %122 = vmatprep.subr.mxu0 0.0
    %123 = vmatpush1.msra.mxu0 %v83
    %124 = vmatprep.subr.mxu0 0.0
    %125 = vmatpush1.msra.mxu0 %v82
    %126 = vmatprep.subr.mxu0 0.0
    %127 = vmatpush1.msra.mxu0 %v81
    %128 = vmatprep.subr.mxu0 0.0
    %129 = vmatpush2.msra.mxu0 0.0
    %130 = vmatprep.subr.mxu0 0.0
    %131 = vmatpush2.msra.mxu0 0.0
    %132 = vmatprep.subr.mxu0 0.0
    %133 = vmatpush2.msra.mxu0 0.0
    %134 = vmatprep.subr.mxu0 0.0
    %135 = vmatpush2.msra.mxu0 0.0
    %136 = vmatprep.subr.mxu0 0.0
    %137 = vmatpush2.msra.mxu0 0.0
    %138 = vmatprep.subr.mxu0 0.0
    %139 = vmatpush2.msra.mxu0 0.0
    %140 = vmatprep.subr.mxu0 0.0
    %141 = vmatpush2.msra.mxu0 0.0
    %142 = vmatprep.subr.mxu0 0.0
    %143 = vmatpush2.msra.mxu0 0.0
    %144 = vmatprep.subr.mxu0 0.0
    %145 = vmatpush2.msra.mxu0 0.0
    %146 = vmatprep.subr.mxu0 0.0
    %147 = vmatpush2.msra.mxu0 0.0
    %148 = vmatprep.subr.mxu0 0.0
    %149 = vmatpush2.msra.mxu0 0.0
    %150 = vmatprep.subr.mxu0 0.0
    %151 = vmatpush2.msra.mxu0 0.0
    %152 = vmatprep.subr.mxu0 0.0
    %153 = vmatpush2.msra.mxu0 0.0
    %154 = vmatprep.subr.mxu0 0.0
    %155 = vmatpush2.msra.mxu0 0.0
    %156 = vmatprep.subr.mxu0 0.0
    %157 = vmatpush2.msra.mxu0 0.0
    %158 = vmatprep.subr.mxu0 0.0
    %159 = vmatpush2.msra.mxu0 0.0
    %160 = vmatprep.mubr.f32.mxu0 0.0
    %161 = vmatmul.mubr.f32.gmra.mxu0 %v94
    %v162 = vpop.f32.mrf.mxu0
    %v163 = vadd.f32 %v90, %v162
    %v164 = vpop.f32.mrf.mxu0
    %165 = vdwg.mxu0
    %v166 = vmax.f32 %v163, 0.0
    %v167 = vld [vmem:[#allocation7] sm:$0xff]
    %v168 = vld [vmem:[#allocation7 + $0x8] sm:$0xff]
    %v169 = vld [vmem:[#allocation7 + $0x10] sm:$0xff]
    %v170 = vld [vmem:[#allocation7 + $0x18] sm:$0xff]
    %v171 = vld [vmem:[#allocation7 + $0x20] sm:$0xff]
    %v172 = vld [vmem:[#allocation7 + $0x28] sm:$0xff]
    %v173 = vld [vmem:[#allocation7 + $0x30] sm:$0xff]
    %v174 = vld [vmem:[#allocation7 + $0x38] sm:$0xff]
    %v175 = vld [vmem:[#allocation7 + $0x40] sm:$0xff]
    %v176 = vld [vmem:[#allocation7 + $0x48] sm:$0xff]
    %v177 = vld [vmem:[#allocation7 + $0x50] sm:$0xff]
    %v178 = vld [vmem:[#allocation7 + $0x58] sm:$0xff]
    %v179 = vld [vmem:[#allocation7 + $0x60] sm:$0xff]
    %v180 = vld [vmem:[#allocation7 + $0x68] sm:$0xff]
    %v181 = vld [vmem:[#allocation7 + $0x70] sm:$0xff]
    %v182 = vld [vmem:[#allocation7 + $0x78] sm:$0xff]
    %v183 = vld [vmem:[%s4] sm:$0x1]
    %v185 = vlaneseq
    %v186 = vshrl.u32 %v185, 7
    %v187 = vsub.s32 0, %v186
    %v188 = vrot.slane %v183, %v187
    %190 = vmatprep.subr.mxu0 0.0
    %191 = vmatpush1.msra.mxu0 %v182
    %192 = vmatprep.subr.mxu0 0.0
    %193 = vmatpush1.msra.mxu0 %v181
    %194 = vmatprep.subr.mxu0 0.0
    %195 = vmatpush1.msra.mxu0 %v180
    %196 = vmatprep.subr.mxu0 0.0
    %197 = vmatpush1.msra.mxu0 %v179
    %198 = vmatprep.subr.mxu0 0.0
    %199 = vmatpush1.msra.mxu0 %v178
    %200 = vmatprep.subr.mxu0 0.0
    %201 = vmatpush1.msra.mxu0 %v177
    %202 = vmatprep.subr.mxu0 0.0
    %203 = vmatpush1.msra.mxu0 %v176
    %204 = vmatprep.subr.mxu0 0.0
    %205 = vmatpush1.msra.mxu0 %v175
    %206 = vmatprep.subr.mxu0 0.0
    %207 = vmatpush1.msra.mxu0 %v174
    %208 = vmatprep.subr.mxu0 0.0
    %209 = vmatpush1.msra.mxu0 %v173
    %210 = vmatprep.subr.mxu0 0.0
    %211 = vmatpush1.msra.mxu0 %v172
    %212 = vmatprep.subr.mxu0 0.0
    %213 = vmatpush1.msra.mxu0 %v171
    %214 = vmatprep.subr.mxu0 0.0
    %215 = vmatpush1.msra.mxu0 %v170
    %216 = vmatprep.subr.mxu0 0.0
    %217 = vmatpush1.msra.mxu0 %v169
    %218 = vmatprep.subr.mxu0 0.0
    %219 = vmatpush1.msra.mxu0 %v168
    %220 = vmatprep.subr.mxu0 0.0
    %221 = vmatpush1.msra.mxu0 %v167
    %222 = vmatprep.subr.mxu0 0.0
    %223 = vmatpush2.msra.mxu0 0.0
    %224 = vmatprep.subr.mxu0 0.0
    %225 = vmatpush2.msra.mxu0 0.0
    %226 = vmatprep.subr.mxu0 0.0
    %227 = vmatpush2.msra.mxu0 0.0
    %228 = vmatprep.subr.mxu0 0.0
    %229 = vmatpush2.msra.mxu0 0.0
    %230 = vmatprep.subr.mxu0 0.0
    %231 = vmatpush2.msra.mxu0 0.0
    %232 = vmatprep.subr.mxu0 0.0
    %233 = vmatpush2.msra.mxu0 0.0
    %234 = vmatprep.subr.mxu0 0.0
    %235 = vmatpush2.msra.mxu0 0.0
    %236 = vmatprep.subr.mxu0 0.0
    %237 = vmatpush2.msra.mxu0 0.0
    %238 = vmatprep.subr.mxu0 0.0
    %239 = vmatpush2.msra.mxu0 0.0
    %240 = vmatprep.subr.mxu0 0.0
    %241 = vmatpush2.msra.mxu0 0.0
    %242 = vmatprep.subr.mxu0 0.0
    %243 = vmatpush2.msra.mxu0 0.0
    %244 = vmatprep.subr.mxu0 0.0
    %245 = vmatpush2.msra.mxu0 0.0
    %246 = vmatprep.subr.mxu0 0.0
    %247 = vmatpush2.msra.mxu0 0.0
    %248 = vmatprep.subr.mxu0 0.0
    %249 = vmatpush2.msra.mxu0 0.0
    %250 = vmatprep.subr.mxu0 0.0
    %251 = vmatpush2.msra.mxu0 0.0
    %252 = vmatprep.subr.mxu0 0.0
    %253 = vmatpush2.msra.mxu0 0.0
    %254 = vmatprep.mubr.f32.mxu0 0.0
    %255 = vmatmul.mubr.f32.gmra.mxu0 %v166
    %v256 = vpop.f32.mrf.mxu0
    %v257 = vadd.f32 %v188, %v256
    %v258 = vpop.f32.mrf.mxu0
    %259 = vdwg.mxu0
    %v260 = vmax.f32 %v257, 0.0
    %v261 = vld [vmem:[#allocation8] sm:$0xff]
    %v262 = vld [vmem:[#allocation8 + $0x8] sm:$0xff]
    %v263 = vld [vmem:[#allocation8 + $0x10] sm:$0xff]
    %v264 = vld [vmem:[#allocation8 + $0x18] sm:$0xff]
    %v265 = vld [vmem:[#allocation8 + $0x20] sm:$0xff]
    %v266 = vld [vmem:[#allocation8 + $0x28] sm:$0xff]
    %v267 = vld [vmem:[#allocation8 + $0x30] sm:$0xff]
    %v268 = vld [vmem:[#allocation8 + $0x38] sm:$0xff]
    %v269 = vld [vmem:[#allocation8 + $0x40] sm:$0xff]
    %v270 = vld [vmem:[#allocation8 + $0x48] sm:$0xff]
    %v271 = vld [vmem:[#allocation8 + $0x50] sm:$0xff]
    %v272 = vld [vmem:[#allocation8 + $0x58] sm:$0xff]
    %v273 = vld [vmem:[#allocation8 + $0x60] sm:$0xff]
    %v274 = vld [vmem:[#allocation8 + $0x68] sm:$0xff]
    %v275 = vld [vmem:[#allocation8 + $0x70] sm:$0xff]
    %v276 = vld [vmem:[#allocation8 + $0x78] sm:$0xff]
    %v277 = vld [vmem:[%s6] sm:$0x1]
    %v279 = vlaneseq
    %v280 = vshrl.u32 %v279, 7
    %v281 = vsub.s32 0, %v280
    %v282 = vrot.slane %v277, %v281
    %284 = vmatprep.subr.mxu0 0.0
    %285 = vmatpush1.msra.mxu0 %v276
    %286 = vmatprep.subr.mxu0 0.0
    %287 = vmatpush1.msra.mxu0 %v275
    %288 = vmatprep.subr.mxu0 0.0
    %289 = vmatpush1.msra.mxu0 %v274
    %290 = vmatprep.subr.mxu0 0.0
    %291 = vmatpush1.msra.mxu0 %v273
    %292 = vmatprep.subr.mxu0 0.0
    %293 = vmatpush1.msra.mxu0 %v272
    %294 = vmatprep.subr.mxu0 0.0
    %295 = vmatpush1.msra.mxu0 %v271
    %296 = vmatprep.subr.mxu0 0.0
    %297 = vmatpush1.msra.mxu0 %v270
    %298 = vmatprep.subr.mxu0 0.0
    %299 = vmatpush1.msra.mxu0 %v269
    %300 = vmatprep.subr.mxu0 0.0
    %301 = vmatpush1.msra.mxu0 %v268
    %302 = vmatprep.subr.mxu0 0.0
    %303 = vmatpush1.msra.mxu0 %v267
    %304 = vmatprep.subr.mxu0 0.0
    %305 = vmatpush1.msra.mxu0 %v266
    %306 = vmatprep.subr.mxu0 0.0
    %307 = vmatpush1.msra.mxu0 %v265
    %308 = vmatprep.subr.mxu0 0.0
    %309 = vmatpush1.msra.mxu0 %v264
    %310 = vmatprep.subr.mxu0 0.0
    %311 = vmatpush1.msra.mxu0 %v263
    %312 = vmatprep.subr.mxu0 0.0
    %313 = vmatpush1.msra.mxu0 %v262
    %314 = vmatprep.subr.mxu0 0.0
    %315 = vmatpush1.msra.mxu0 %v261
    %316 = vmatprep.subr.mxu0 0.0
    %317 = vmatpush2.msra.mxu0 0.0
    %318 = vmatprep.subr.mxu0 0.0
    %319 = vmatpush2.msra.mxu0 0.0
    %320 = vmatprep.subr.mxu0 0.0
    %321 = vmatpush2.msra.mxu0 0.0
    %322 = vmatprep.subr.mxu0 0.0
    %323 = vmatpush2.msra.mxu0 0.0
    %324 = vmatprep.subr.mxu0 0.0
    %325 = vmatpush2.msra.mxu0 0.0
    %326 = vmatprep.subr.mxu0 0.0
    %327 = vmatpush2.msra.mxu0 0.0
    %328 = vmatprep.subr.mxu0 0.0
    %329 = vmatpush2.msra.mxu0 0.0
    %330 = vmatprep.subr.mxu0 0.0
    %331 = vmatpush2.msra.mxu0 0.0
    %332 = vmatprep.subr.mxu0 0.0
    %333 = vmatpush2.msra.mxu0 0.0
    %334 = vmatprep.subr.mxu0 0.0
    %335 = vmatpush2.msra.mxu0 0.0
    %336 = vmatprep.subr.mxu0 0.0
    %337 = vmatpush2.msra.mxu0 0.0
    %338 = vmatprep.subr.mxu0 0.0
    %339 = vmatpush2.msra.mxu0 0.0
    %340 = vmatprep.subr.mxu0 0.0
    %341 = vmatpush2.msra.mxu0 0.0
    %342 = vmatprep.subr.mxu0 0.0
    %343 = vmatpush2.msra.mxu0 0.0
    %344 = vmatprep.subr.mxu0 0.0
    %345 = vmatpush2.msra.mxu0 0.0
    %346 = vmatprep.subr.mxu0 0.0
    %347 = vmatpush2.msra.mxu0 0.0
    %348 = vmatprep.mubr.f32.mxu0 0.0
    %349 = vmatmul.mubr.f32.gmra.mxu0 %v260
    %v350 = vpop.f32.mrf.mxu0
    %v351 = vadd.f32 %v282, %v350
    %v352 = vpop.f32.mrf.mxu0
    %353 = vdwg.mxu0
    %354 = vst [vmem:[#allocation10] sm:$0xff] %v351
    // Predicated region
    $region46: #{neural_network_forward.1} parent=1 // pred_check
      _
    $region47: #{neural_network_forward.1} parent=1 // pred_check_branch
      %356 = sbr.rel (0) target = $region49
    $region48: #{neural_network_forward.1} parent=1 // pred_region
      %s358 = ssub.s32 128, 128
      %359 = vsyncadd [#allocation4], %s358
      %s361 = sshll.u32 [#allocation10], 4
      %s362 = int_to_ptr.vmem [resolvable:$true] %s361
      %364 = dma.vmem_to_hbm [thread:$0]  %s362, 128, %s7, [#allocation4]
    $region49: #{neural_network_forward.1} parent=1 // pred_fallthru
      _
    // Predicated region
    $region50: #{neural_network_forward.1} parent=1 // pred_check
      _
    $region51: #{neural_network_forward.1} parent=1 // pred_check_branch
      %366 = sbr.rel (0) target = $region53
    $region52: #{neural_network_forward.1} parent=1 // pred_region
      %367 = dma.done [#allocation4], 128
    $region53: #{neural_network_forward.1} parent=1 // pred_fallthru
      _
    %368 = vsyncpa [#allocation3], 1
    %369 = vsyncpa [#allocation6], 1
    %370 = vsyncpa [#allocation9], 1
    %371 = vsyncpa [#allocation4], 1

</llo_original>
